<compile_context>
chip_gen: v7x
topology: tpu7x:2x2x1
jax: 0.10.0
libtpu: 0.0.40
codegen_flags: <defaults>
</compile_context>

<pallas_src>
import functools
import math

import jax
import jax.numpy as jnp
from jax.experimental import pallas as pl
from jax.experimental.pallas import tpu as pltpu


def _round_up(n, m):
    return ((n + m - 1) // m) * m


def _arcface_kernel(lbl_ref, x_ref, w_ref, out_ref, cos_ref,
                    *, scale, cos_m, sin_m, threshold, mm, tc):
    j = pl.program_id(0)                                  # class-tile index

    # cosine = xn @ wn^T.  Both operands arrive pre-normalized in bf16;
    # contract the last dims of both (MXU-native, no transpose), f32 accum.
    cosine = jax.lax.dot_general(
        x_ref[...], w_ref[...],
        dimension_numbers=(((1,), (1,)), ((), ())),
        preferred_element_type=jnp.float32)               # (TB, TC) f32

    # Boolean label mask for this class tile (iota-compare replaces the
    # in-place scatter_ of the PyTorch module).
    lbl = lbl_ref[...]                                    # (TB, 1) i32
    classes = jax.lax.broadcasted_iota(jnp.int32, cosine.shape, 1) + j * tc
    is_lbl = classes == lbl                               # (TB, TC) bool

    # Margin path only at the label column: (TB, 1) vectors, not (TB, TC).
    cos_lbl = jnp.sum(jnp.where(is_lbl, cosine, 0.0), axis=-1, keepdims=True)
    sine_lbl = jnp.sqrt(jnp.clip(1.0 - cos_lbl * cos_lbl, 0.0, 1.0))
    phi_lbl = cos_lbl * cos_m - sine_lbl * sin_m
    phi_lbl = jnp.where(cos_lbl > threshold, phi_lbl, cos_lbl - mm)

    # output = cosine everywhere except the label column, which gets phi.
    out_ref[...] = (jnp.where(is_lbl, phi_lbl, cosine) * scale).astype(
        out_ref.dtype)
    cos_ref[...] = (cosine * scale).astype(cos_ref.dtype)


def arcface_forward(x, weight, label, *, scale=30.0, margin=0.5,
                    tb=256, tc=1024, cos_dtype=jnp.bfloat16):
    """Returns (output, cosine * scale), shapes (B, out_features).

    `output` is float32; the auxiliary `cosine * scale` defaults to bfloat16
    (already bf16-precision after the bf16 MXU contraction) to cut HBM
    writeback — pass cos_dtype=jnp.float32 for the module's exact dtype.
    """
    B, D = x.shape
    C, D2 = weight.shape
    assert D == D2

    cos_m = float(math.cos(margin))
    sin_m = float(math.sin(margin))
    threshold = float(math.cos(math.pi - margin))
    mm = float(math.sin(math.pi - margin) * margin)

    # Pre-normalize both operands once in the wrapper (negligible next to the
    # (B, C, D) contraction), cast to bf16 for MXU-native streaming.
    x_f = x.astype(jnp.float32)
    w_f = weight.astype(jnp.float32)
    xn = (x_f * jax.lax.rsqrt(jnp.maximum(
        jnp.sum(x_f * x_f, axis=1, keepdims=True), 1e-24))).astype(jnp.bfloat16)
    wn = (w_f * jax.lax.rsqrt(jnp.maximum(
        jnp.sum(w_f * w_f, axis=1, keepdims=True), 1e-24))).astype(jnp.bfloat16)

    # Tile selection: sublanes multiple of 16 (bf16 packing), lanes multiple
    # of 128; shrink toward the VMEM budget of the current chip generation.
    TB = min(tb, _round_up(B, 16))
    TC = min(tc, _round_up(C, 128))

    try:
        vmem_cap = int(pltpu.get_tpu_info().vmem_capacity_bytes)
    except Exception:
        vmem_cap = 64 * 1024 * 1024          # conservative (v7x) fallback

    cos_size = jnp.dtype(cos_dtype).itemsize

    def working_set(tb_, tc_):
        # Double-buffered pipeline tiles + in-kernel f32 temporaries.
        return (2 * tb_ * D * 2              # x tile (bf16)
                + 2 * tc_ * D * 2            # weight tile (bf16)
                + 2 * tb_ * tc_ * 4          # output tile (f32)
                + 2 * tb_ * tc_ * cos_size   # cosine output tile
                + 2 * tb_ * 4                # label tile
                + 3 * tb_ * tc_ * 4)         # cosine / select temporaries

    budget = int(0.70 * vmem_cap)
    while working_set(TB, TC) > budget and TC > 128:
        TC = max(128, TC // 2)
    while working_set(TB, TC) > budget and TB > 16:
        TB = max(16, TB // 2)

    Bp = _round_up(B, TB)
    Cp = _round_up(C, TC)

    lbl2d = label.reshape(B, 1).astype(jnp.int32)
    if Bp != B:
        xn = jnp.pad(xn, ((0, Bp - B), (0, 0)))
        lbl2d = jnp.pad(lbl2d, ((0, Bp - B), (0, 0)), constant_values=-1)
    if Cp != C:
        wn = jnp.pad(wn, ((0, Cp - C), (0, 0)))

    kernel = functools.partial(
        _arcface_kernel, scale=float(scale), cos_m=cos_m, sin_m=sin_m,
        threshold=threshold, mm=mm, tc=TC)

    vmem_limit = int(min(max(int(1.5 * working_set(TB, TC)), 16 * 1024 * 1024),
                         int(0.75 * vmem_cap)))

    # Class tiles are the OUTER grid axis: the large (TC, D) weight tile is
    # DMA'd once per class tile while the small (TB, D) x tile is the
    # re-streamed operand.  No cross-iteration state -> both axes parallel.
    out, cos_scaled = pl.pallas_call(
        kernel,
        out_shape=(jax.ShapeDtypeStruct((Bp, Cp), jnp.float32),
                   jax.ShapeDtypeStruct((Bp, Cp), cos_dtype)),
        grid=(Cp // TC, Bp // TB),
        in_specs=[
            pl.BlockSpec((TB, 1), lambda j, i: (i, 0)),   # labels
            pl.BlockSpec((TB, D), lambda j, i: (i, 0)),   # normalized x (bf16)
            pl.BlockSpec((TC, D), lambda j, i: (j, 0)),   # normalized w (bf16)
        ],
        out_specs=(
            pl.BlockSpec((TB, TC), lambda j, i: (i, j)),
            pl.BlockSpec((TB, TC), lambda j, i: (i, j)),
        ),
        compiler_params=pltpu.CompilerParams(
            dimension_semantics=("parallel", "parallel"),
            vmem_limit_bytes=vmem_limit),
    )(lbl2d, xn, wn)

    return out[:B, :C], cos_scaled[:B, :C]


def _reference(x, weight, label, scale=30.0, margin=0.5):
    # Pure-JAX f32 reference mirroring the PyTorch forward.
    cos_m = math.cos(margin)
    sin_m = math.sin(margin)
    threshold = math.cos(math.pi - margin)
    mm = math.sin(math.pi - margin) * margin
    xn = x / jnp.maximum(jnp.linalg.norm(x, axis=1, keepdims=True), 1e-12)
    wn = weight / jnp.maximum(
        jnp.linalg.norm(weight, axis=1, keepdims=True), 1e-12)
    cosine = xn @ wn.T
    sine = jnp.sqrt(jnp.clip(1.0 - cosine ** 2, 0.0, 1.0))
    phi = cosine * cos_m - sine * sin_m
    phi = jnp.where(cosine > threshold, phi, cosine - mm)
    one_hot = jax.nn.one_hot(label, weight.shape[0], dtype=cosine.dtype)
    out = (one_hot * phi + (1.0 - one_hot) * cosine) * scale
    return out, cosine * scale


if __name__ == "__main__":
    key = jax.random.PRNGKey(0)
    k_x, k_w, k_l = jax.random.split(key, 3)

    B = 32              # batch
    in_features = 32    # embedding dim
    out_features = 256  # number of classes

    x = jax.random.normal(k_x, (B, in_features), dtype=jnp.float32)
    label = jax.random.randint(k_l, (B,), 0, out_features, dtype=jnp.int32)

    # Deterministic xavier_uniform_ init for weight (out_features, in_features)
    bound = math.sqrt(6.0 / (in_features + out_features))
    weight = jax.random.uniform(
        k_w, (out_features, in_features), dtype=jnp.float32,
        minval=-bound, maxval=bound)

    # Small tiles so the (2, 2) grid / pipelining is actually exercised.
    out, cos_scaled = arcface_forward(x, weight, label,
                                      scale=30.0, margin=0.5, tb=16, tc=128)
    jax.block_until_ready((out, cos_scaled))

    ref_out, ref_cos = _reference(x, weight, label, scale=30.0, margin=0.5)
    # bf16 MXU operands (f32 accumulation) + bf16 cosine output: allow ~1.5%
    # of the scale=30 range.
    assert out.shape == ref_out.shape and cos_scaled.shape == ref_cos.shape
    assert jnp.allclose(out, ref_out, atol=0.5, rtol=2e-2), (
        float(jnp.max(jnp.abs(out - ref_out))))
    assert jnp.allclose(cos_scaled.astype(jnp.float32), ref_cos,
                        atol=0.5, rtol=2e-2), (
        float(jnp.max(jnp.abs(cos_scaled.astype(jnp.float32) - ref_cos))))

    print("KERNEL_OK")
</pallas_src>

<mosaic_0001>
module attributes {stable_mosaic.version = 11 : i64} {
  func.func @_arcface_kernel(%arg0: i32, %arg1: i32, %arg2: memref<16x1xi32, #tpu.memory_space<vmem>>, %arg3: memref<16x32xbf16, #tpu.memory_space<vmem>>, %arg4: memref<128x32xbf16, #tpu.memory_space<vmem>>, %arg5: memref<16x128xf32, #tpu.memory_space<vmem>>, %arg6: memref<16x128xbf16, #tpu.memory_space<vmem>>) attributes {dimension_semantics = [#tpu.dimension_semantics<parallel>, #tpu.dimension_semantics<parallel>], iteration_bounds = array<i64: 2, 2>, scalar_prefetch = 0 : i64, scratch_operands = 0 : i64, tpu.core_type = #tpu.core_type<tc>, window_params = [{transform_indices = @transform_0, window_bounds = array<i64: 16, 1>}, {transform_indices = @transform_1, window_bounds = array<i64: 16, 32>}, {transform_indices = @transform_2, window_bounds = array<i64: 128, 32>}, {transform_indices = @transform_3, window_bounds = array<i64: 16, 128>}, {transform_indices = @transform_4, window_bounds = array<i64: 16, 128>}]} {
    %c0 = arith.constant 0 : index
    %c0_0 = arith.constant 0 : index
    %0 = vector.load %arg3[%c0, %c0_0] : memref<16x32xbf16, #tpu.memory_space<vmem>>, vector<16x32xbf16>
    %c0_1 = arith.constant 0 : index
    %c0_2 = arith.constant 0 : index
    %1 = vector.load %arg4[%c0_1, %c0_2] : memref<128x32xbf16, #tpu.memory_space<vmem>>, vector<128x32xbf16>
    %cst = arith.constant dense<0.000000e+00> : vector<16x128xf32>
    %2 = tpu.matmul %0, %1, %cst {dimension_numbers = #tpu.dot_dimension_numbers<[1], [1], [0], [0], [0, 0, 1, 0], [], []>} : vector<16x32xbf16>, vector<128x32xbf16>, vector<16x128xf32> -> vector<16x128xf32>
    %c0_3 = arith.constant 0 : index
    %c0_4 = arith.constant 0 : index
    %3 = vector.load %arg2[%c0_3, %c0_4] : memref<16x1xi32, #tpu.memory_space<vmem>>, vector<16x1xi32>
    %4 = tpu.iota {dimensions = array<i32: 1>} : vector<16x128xi32>
    %c128_i32 = arith.constant 128 : i32
    %5 = arith.muli %arg0, %c128_i32 : i32
    %6 = vector.broadcast %5 : i32 to vector<16x128xi32>
    %7 = arith.addi %4, %6 : vector<16x128xi32>
    %8 = vector.broadcast %3 : vector<16x1xi32> to vector<16x128xi32>
    %9 = arith.cmpi eq, %7, %8 : vector<16x128xi32>
    %cst_5 = arith.constant 0.000000e+00 : f32
    %10 = vector.broadcast %cst_5 : f32 to vector<16x128xf32>
    %11 = arith.select %9, %2, %10 : vector<16x128xi1>, vector<16x128xf32>
    %cst_6 = arith.constant dense<0.000000e+00> : vector<16xf32>
    %12 = vector.multi_reduction <add>, %11, %cst_6 [1] : vector<16x128xf32> to vector<16xf32>
    %13 = vector.shape_cast %12 : vector<16xf32> to vector<16x1xf32>
    %14 = arith.mulf %13, %13 : vector<16x1xf32>
    %cst_7 = arith.constant 1.000000e+00 : f32
    %15 = vector.broadcast %cst_7 : f32 to vector<16x1xf32>
    %16 = arith.subf %15, %14 : vector<16x1xf32>
    %cst_8 = arith.constant 0.000000e+00 : f32
    %cst_9 = arith.constant 1.000000e+00 : f32
    %17 = vector.broadcast %cst_8 : f32 to vector<16x1xf32>
    %18 = arith.maximumf %17, %16 : vector<16x1xf32>
    %19 = vector.broadcast %cst_9 : f32 to vector<16x1xf32>
    %20 = arith.minimumf %19, %18 : vector<16x1xf32>
    %21 = math.sqrt %20 : vector<16x1xf32>
    %cst_10 = arith.constant 0.87758255 : f32
    %22 = vector.broadcast %cst_10 : f32 to vector<16x1xf32>
    %23 = arith.mulf %13, %22 : vector<16x1xf32>
    %cst_11 = arith.constant 0.47942555 : f32
    %24 = vector.broadcast %cst_11 : f32 to vector<16x1xf32>
    %25 = arith.mulf %21, %24 : vector<16x1xf32>
    %26 = arith.subf %23, %25 : vector<16x1xf32>
    %cst_12 = arith.constant -0.87758255 : f32
    %27 = vector.broadcast %cst_12 : f32 to vector<16x1xf32>
    %28 = arith.cmpf ogt, %13, %27 : vector<16x1xf32>
    %cst_13 = arith.constant 0.239712775 : f32
    %29 = vector.broadcast %cst_13 : f32 to vector<16x1xf32>
    %30 = arith.subf %13, %29 : vector<16x1xf32>
    %31 = arith.select %28, %26, %30 : vector<16x1xi1>, vector<16x1xf32>
    %32 = vector.shape_cast %31 : vector<16x1xf32> to vector<16x1xf32>
    %33 = vector.broadcast %32 : vector<16x1xf32> to vector<16x128xf32>
    %34 = arith.select %9, %33, %2 : vector<16x128xi1>, vector<16x128xf32>
    %cst_14 = arith.constant 3.000000e+01 : f32
    %35 = vector.broadcast %cst_14 : f32 to vector<16x128xf32>
    %36 = arith.mulf %34, %35 : vector<16x128xf32>
    %c0_15 = arith.constant 0 : index
    %c0_16 = arith.constant 0 : index
    %37 = vector.load %arg5[%c0_15, %c0_16] : memref<16x128xf32, #tpu.memory_space<vmem>>, vector<16x128xf32>
    tpu.vector_store %arg5[%c0_15, %c0_16], %36 {strides = array<i32>} : memref<16x128xf32, #tpu.memory_space<vmem>>, vector<16x128xf32>,
    %cst_17 = arith.constant 3.000000e+01 : f32
    %38 = vector.broadcast %cst_17 : f32 to vector<16x128xf32>
    %39 = arith.mulf %2, %38 : vector<16x128xf32>
    %40 = arith.truncf %39 : vector<16x128xf32> to vector<16x128xbf16>
    %c0_18 = arith.constant 0 : index
    %c0_19 = arith.constant 0 : index
    %41 = vector.load %arg6[%c0_18, %c0_19] : memref<16x128xbf16, #tpu.memory_space<vmem>>, vector<16x128xbf16>
    tpu.vector_store %arg6[%c0_18, %c0_19], %40 {strides = array<i32>} : memref<16x128xbf16, #tpu.memory_space<vmem>>, vector<16x128xbf16>,
    return
  }
  func.func @transform_0(%arg0: i32, %arg1: i32) -> (i32, i32) {
    %c0_i32 = arith.constant 0 : i32
    %c0_i32_0 = arith.constant 0 : i32
    return %arg1, %c0_i32 : i32, i32
  }
  func.func @transform_1(%arg0: i32, %arg1: i32) -> (i32, i32) {
    %c0_i32 = arith.constant 0 : i32
    %c0_i32_0 = arith.constant 0 : i32
    return %arg1, %c0_i32 : i32, i32
  }
  func.func @transform_2(%arg0: i32, %arg1: i32) -> (i32, i32) {
    %c0_i32 = arith.constant 0 : i32
    %c0_i32_0 = arith.constant 0 : i32
    return %arg0, %c0_i32 : i32, i32
  }
  func.func @transform_3(%arg0: i32, %arg1: i32) -> (i32, i32) {
    %c0_i32 = arith.constant 0 : i32
    return %arg1, %arg0 : i32, i32
  }
  func.func @transform_4(%arg0: i32, %arg1: i32) -> (i32, i32) {
    %c0_i32 = arith.constant 0 : i32
    return %arg1, %arg0 : i32, i32
  }
}

</mosaic_0001>

<llo_original>
// kernel: tpu_custom_call.1
$region0: #{tpu_custom_call.1}
  #allocation0 [shape = 'u32[]', space=smem, size = 0x4, offset = 0x4, fixed_abs, tag = 'smem constant byte address 0x4 - core index']
  #allocation1 [shape = 'u32[144,128]{1,0:T(1,128)}', space=vmem, size = 0x12000, scoped, tag = 'internal scratch']
  %s0 = inlined_call_operand.vmem [shape: s32[32,1], index: 0, kind: input, shape index: {}]
  %s1 = inlined_call_operand.vmem [shape: bf16[32,32], index: 1, kind: input, shape index: {}]
  %s2 = inlined_call_operand.vmem [shape: bf16[256,32], index: 2, kind: input, shape index: {}]
  %s3 = inlined_call_operand.hbm [shape: f32[32,256], index: 3, kind: output, shape index: {0}]
  %s4 = inlined_call_operand.hbm [shape: bf16[32,256], index: 4, kind: output, shape index: {1}]
  %5 = xla_tuple %s3, %s4
  %s6 = sld [smem:[#allocation0]]
  $region53: #{tpu_custom_call.1} parent=0
    _
  %s8 = ssub.s32 1, %s6
  %s9 = scalar_select 0, %s8, %s6
  $region1: #{tpu_custom_call.1} parent=0
    #allocation2 [shape = 'u8[16384]{0}', space=vmem, size = 0x4000, scoped, tag = 'output window, operand 0']
    #allocation3 [shape = 's32[2]{0}', space=sflag, size = 0x8, scoped, tag = 'scoped memory for tpu_custom_call.1']
    #allocation4 [shape = 'u8[8192]{0}', space=vmem, size = 0x2000, scoped, tag = 'output window, operand 1']
    #allocation5 [shape = 's32[2]{0}', space=sflag, size = 0x8, scoped, tag = 'scoped memory for tpu_custom_call.1']
    %10 = vsyncpa [#allocation3], 0
    %s11 = scalar_lea.sflag [#allocation3], 1
    %12 = vsyncpa %s11, 0
    %13 = vsyncpa [#allocation5], 0
    %s14 = scalar_lea.sflag [#allocation5], 1
    %15 = vsyncpa %s14, 0
    loop: start=0, step=1, limit=6
    $region2: #{tpu_custom_call.1} parent=1 // loop_pre_header
      _
    $region3: #{tpu_custom_call.1} parent=1 // loop_header
      %s17 = sphi 0, %s21
      %p18 = scmp.ge.s32.totalorder %s17, 6
      %s24 = sphi 0, %s36
      %s25 = sphi 0, %s32
      %s26 = sphi 0, %s24
      %s27 = sphi 0, %s25
      %s28 = sphi 0, %s26
      %s29 = sphi 0, %s27
      %s39 = sphi 0, %s41
      %s42 = sphi 0, %s39
      %s43 = sphi 0, %s42
      %s59 = sphi 0, %s43
      %s65 = sphi 0, %s67
      %s68 = sphi 0, %s65
      %s69 = sphi 0, %s68
      %s85 = sphi 0, %s69
      %s91 = sphi 0, %s93
      %s94 = sphi 0, %s91
      %s95 = sphi 0, %s94
      %s111 = sphi 0, %s95
      %s119 = sphi 0, %s121
      %s122 = sphi 0, %s119
      %s123 = sphi 0, %s122
      %s139 = sphi 0, %s123
      %s147 = sphi 0, %s149
      %s150 = sphi 0, %s147
      %s151 = sphi 0, %s150
      %s167 = sphi 0, %s151
    $region4: #{tpu_custom_call.1} parent=1 // loop_header_branch
      %20 = sbr.rel (%p18) target = $region8
    $region5: #{tpu_custom_call.1} parent=1 // loop_body
      %s22 = ssub.s32 %s17, 1
      %s23 = ssub.s32 %s17, 2
      %s30 = sadd.s32 1, %s25
      %p31 = scmp.ge.s32.totalorder %s30, 2
      %s32 = scalar_select %p31, 0, %s30
      %s33 = sadd.s32 1, %s24
      %s34 = scalar_select %p31, %s33, %s24
      %p35 = scmp.ge.s32.totalorder %s34, 2
      %s36 = scalar_select %p35, 0, %s34
      %s37 = ssub.s32 %s25, %s32
      %p38 = scmp.eq.s32.totalorder %s37, 0
      %s40 = sadd.s32 %s39, 1
      %s41 = scalar_select %p38, %s39, %s40
      %p44 = pneg %p38
      %p45 = scmp.eq.s32.totalorder %s17, 3
      %p46 = por %p44, %p45
      %p47 = scmp.ne.s32.totalorder %s39, %s42
      %p48 = scmp.eq.s32.totalorder %s17, 0
      %p49 = por %p47, %p48
      %p50 = scmp.ne.s32.totalorder %s39, %s42
      %p51 = scmp.eq.s32.totalorder %s22, 3
      %p52 = por %p50, %p51
      %p53 = scmp.ne.s32.totalorder %s42, %s43
      %p54 = scmp.eq.s32.totalorder %s22, 0
      %p55 = por %p53, %p54
      %p56 = scmp.ne.s32.totalorder %s42, %s43
      %p57 = scmp.eq.s32.totalorder %s23, 3
      %p58 = por %p56, %p57
      %p60 = scmp.ne.s32.totalorder %s43, %s59
      %p61 = scmp.eq.s32.totalorder %s23, 0
      %p62 = por %p60, %p61
      %s63 = ssub.s32 %s25, %s32
      %p64 = scmp.eq.s32.totalorder %s63, 0
      %s66 = sadd.s32 %s65, 1
      %s67 = scalar_select %p64, %s65, %s66
      %p70 = pneg %p64
      %p71 = scmp.eq.s32.totalorder %s17, 3
      %p72 = por %p70, %p71
      %p73 = scmp.ne.s32.totalorder %s65, %s68
      %p74 = scmp.eq.s32.totalorder %s17, 0
      %p75 = por %p73, %p74
      %p76 = scmp.ne.s32.totalorder %s65, %s68
      %p77 = scmp.eq.s32.totalorder %s22, 3
      %p78 = por %p76, %p77
      %p79 = scmp.ne.s32.totalorder %s68, %s69
      %p80 = scmp.eq.s32.totalorder %s22, 0
      %p81 = por %p79, %p80
      %p82 = scmp.ne.s32.totalorder %s68, %s69
      %p83 = scmp.eq.s32.totalorder %s23, 3
      %p84 = por %p82, %p83
      %p86 = scmp.ne.s32.totalorder %s69, %s85
      %p87 = scmp.eq.s32.totalorder %s23, 0
      %p88 = por %p86, %p87
      %s89 = ssub.s32 %s24, %s36
      %p90 = scmp.eq.s32.totalorder %s89, 0
      %s92 = sadd.s32 %s91, 1
      %s93 = scalar_select %p90, %s91, %s92
      %p96 = pneg %p90
      %p97 = scmp.eq.s32.totalorder %s17, 3
      %p98 = por %p96, %p97
      %p99 = scmp.ne.s32.totalorder %s91, %s94
      %p100 = scmp.eq.s32.totalorder %s17, 0
      %p101 = por %p99, %p100
      %p102 = scmp.ne.s32.totalorder %s91, %s94
      %p103 = scmp.eq.s32.totalorder %s22, 3
      %p104 = por %p102, %p103
      %p105 = scmp.ne.s32.totalorder %s94, %s95
      %p106 = scmp.eq.s32.totalorder %s22, 0
      %p107 = por %p105, %p106
      %p108 = scmp.ne.s32.totalorder %s94, %s95
      %p109 = scmp.eq.s32.totalorder %s23, 3
      %p110 = por %p108, %p109
      %p112 = scmp.ne.s32.totalorder %s95, %s111
      %p113 = scmp.eq.s32.totalorder %s23, 0
      %p114 = por %p112, %p113
      %s115 = ssub.s32 %s25, %s32
      %s116 = ssub.s32 %s24, %s36
      %s117 = sor.u32 %s115, %s116
      %p118 = scmp.eq.s32.totalorder %s117, 0
      %s120 = sadd.s32 %s119, 1
      %s121 = scalar_select %p118, %s119, %s120
      %p124 = pneg %p118
      %p125 = scmp.eq.s32.totalorder %s17, 3
      %p126 = por %p124, %p125
      %p127 = scmp.ne.s32.totalorder %s119, %s122
      %p128 = scmp.eq.s32.totalorder %s17, 0
      %p129 = por %p127, %p128
      %p130 = scmp.ne.s32.totalorder %s119, %s122
      %p131 = scmp.eq.s32.totalorder %s22, 3
      %p132 = por %p130, %p131
      %p133 = scmp.ne.s32.totalorder %s122, %s123
      %p134 = scmp.eq.s32.totalorder %s22, 0
      %p135 = por %p133, %p134
      %p136 = scmp.ne.s32.totalorder %s122, %s123
      %p137 = scmp.eq.s32.totalorder %s23, 3
      %p138 = por %p136, %p137
      %p140 = scmp.ne.s32.totalorder %s123, %s139
      %p141 = scmp.eq.s32.totalorder %s23, 0
      %p142 = por %p140, %p141
      %s143 = ssub.s32 %s25, %s32
      %s144 = ssub.s32 %s24, %s36
      %s145 = sor.u32 %s143, %s144
      %p146 = scmp.eq.s32.totalorder %s145, 0
      %s148 = sadd.s32 %s147, 1
      %s149 = scalar_select %p146, %s147, %s148
      %p152 = pneg %p146
      %p153 = scmp.eq.s32.totalorder %s17, 3
      %p154 = por %p152, %p153
      %p155 = scmp.ne.s32.totalorder %s147, %s150
      %p156 = scmp.eq.s32.totalorder %s17, 0
      %p157 = por %p155, %p156
      %p158 = scmp.ne.s32.totalorder %s147, %s150
      %p159 = scmp.eq.s32.totalorder %s22, 3
      %p160 = por %p158, %p159
      %p161 = scmp.ne.s32.totalorder %s150, %s151
      %p162 = scmp.eq.s32.totalorder %s22, 0
      %p163 = por %p161, %p162
      %p164 = scmp.ne.s32.totalorder %s150, %s151
      %p165 = scmp.eq.s32.totalorder %s23, 3
      %p166 = por %p164, %p165
      %p168 = scmp.ne.s32.totalorder %s151, %s167
      %p169 = scmp.eq.s32.totalorder %s23, 0
      %p170 = por %p168, %p169
      %p171 = scmp.le.s32.totalorder 1, %s17
      %p172 = scmp.lt.s32.totalorder %s17, 5
      %p173 = pnand %p171, %p172
      %p174 = pneg %p173
      // Predicated region
      $region9: #{tpu_custom_call.1} parent=5 // pred_check
        _
      $region10: #{tpu_custom_call.1} parent=5 // pred_check_branch
        %176 = sbr.rel (%p173) target = $region12
      $region11: #{tpu_custom_call.1} parent=5 // pred_region
        %s177 = ssub.s32 %s17, 1
      $region12: #{tpu_custom_call.1} parent=5 // pred_fallthru
        _
      %p178 = scmp.lt.s32.totalorder %s17, 4
      // Predicated region
      $region13: #{tpu_custom_call.1} parent=5 // pred_check
        %p179 = pneg %p178
      $region14: #{tpu_custom_call.1} parent=5 // pred_check_branch
        %181 = sbr.rel (%p179) target = $region16
      $region15: #{tpu_custom_call.1} parent=5 // pred_region
        // Predicated region
        $region17: #{tpu_custom_call.1} parent=15 // pred_check
          %p182 = pneg %p49
        $region18: #{tpu_custom_call.1} parent=15 // pred_check_branch
          %184 = sbr.rel (%p182) target = $region20
        $region19: #{tpu_custom_call.1} parent=15 // pred_region
          %s185 = smul.u32 2, %s25
          %p186 = scmp.lt.s32.totalorder %s185, 3
          %s187 = scalar_select %p186, %s185, 3
          %s188 = smul.addr %s187, 8
          %s189 = scalar_lea.vmem %s0, %s188
          %s190 = smul.u32 2, %s25
        $region20: #{tpu_custom_call.1} parent=15 // pred_fallthru
          _
        // Predicated region
        $region21: #{tpu_custom_call.1} parent=15 // pred_check
          %p191 = pneg %p75
        $region22: #{tpu_custom_call.1} parent=15 // pred_check_branch
          %193 = sbr.rel (%p191) target = $region24
        $region23: #{tpu_custom_call.1} parent=15 // pred_region
          %s194 = smul.u32 2, %s25
          %p195 = scmp.lt.s32.totalorder %s194, 3
          %s196 = scalar_select %p195, %s194, 3
          %s197 = smul.addr %s196, 4
          %s198 = scalar_lea.vmem %s1, %s197
          %s199 = smul.u32 2, %s25
        $region24: #{tpu_custom_call.1} parent=15 // pred_fallthru
          _
        // Predicated region
        $region25: #{tpu_custom_call.1} parent=15 // pred_check
          %p200 = pneg %p101
        $region26: #{tpu_custom_call.1} parent=15 // pred_check_branch
          %202 = sbr.rel (%p200) target = $region28
        $region27: #{tpu_custom_call.1} parent=15 // pred_region
          %s203 = smul.u32 16, %s24
          %p204 = scmp.lt.s32.totalorder %s203, 31
          %s205 = scalar_select %p204, %s203, 31
          %s206 = smul.addr %s205, 4
          %s207 = scalar_lea.vmem %s2, %s206
          %s208 = smul.u32 16, %s24
        $region28: #{tpu_custom_call.1} parent=15 // pred_fallthru
          _
      $region16: #{tpu_custom_call.1} parent=5 // pred_fallthru
        _
      %p209 = scmp.le.s32.totalorder 1, %s17
      %p210 = scmp.lt.s32.totalorder %s17, 5
      %p211 = pnand %p209, %p210
      %p212 = pneg %p211
      // Predicated region
      $region29: #{tpu_custom_call.1} parent=5 // pred_check
        _
      $region30: #{tpu_custom_call.1} parent=5 // pred_check_branch
        %214 = sbr.rel (%p211) target = $region32
      $region31: #{tpu_custom_call.1} parent=5 // pred_region
        %s215 = ssub.s32 %s17, 1
        %s216 = smul.u32 2, %s27
        %p217 = scmp.lt.s32.totalorder %s216, 3
        %s218 = scalar_select %p217, %s216, 3
        %s219 = smul.addr %s218, 8
        %s220 = scalar_lea.vmem %s0, %s219
        %p221 = pneg %p55
        %p222 = pneg %p52
        %s223 = smul.u32 2, %s27
        %p224 = scmp.lt.s32.totalorder %s223, 3
        %s225 = scalar_select %p224, %s223, 3
        %s226 = smul.addr %s225, 4
        %s227 = scalar_lea.vmem %s1, %s226
        %p228 = pneg %p81
        %p229 = pneg %p78
        %s230 = smul.u32 16, %s26
        %p231 = scmp.lt.s32.totalorder %s230, 31
        %s232 = scalar_select %p231, %s230, 31
        %s233 = smul.addr %s232, 4
        %s234 = scalar_lea.vmem %s2, %s233
        %p235 = pneg %p107
        %p236 = pneg %p104
        %p237 = pneg %p135
        %p238 = pneg %p132
        %s239 = sand.u32 %s122, 1
        %s240 = scalar_lea.sflag [#allocation3], %s239
        %s241 = sand.u32 %s122, 1
        %s242 = smul.addr %s241, 16
        %s243 = scalar_lea.vmem [#allocation2], %s242
        %p244 = pneg %p163
        %p245 = pneg %p160
        %s246 = sand.u32 %s150, 1
        %s247 = scalar_lea.sflag [#allocation5], %s246
        %s248 = sand.u32 %s150, 1
        %s249 = smul.addr %s248, 8
        %s250 = scalar_lea.vmem [#allocation4], %s249
        %s251 = smul.u32 2, %s27
        %p252 = scmp.lt.s32.totalorder %s251, 3
        %s253 = scalar_select %p252, %s251, 3
        %s254 = smul.addr %s253, 8
        %s255 = scalar_lea.vmem %s0, %s254
        %s256 = smul.u32 2, %s27
        %s257 = smul.u32 2, %s27
        %p258 = scmp.lt.s32.totalorder %s257, 3
        %s259 = scalar_select %p258, %s257, 3
        %s260 = smul.addr %s259, 4
        %s261 = scalar_lea.vmem %s1, %s260
        %s262 = smul.u32 2, %s27
        %s263 = smul.u32 16, %s26
        %p264 = scmp.lt.s32.totalorder %s263, 31
        %s265 = scalar_select %p264, %s263, 31
        %s266 = smul.addr %s265, 4
        %s267 = scalar_lea.vmem %s2, %s266
        %s268 = smul.u32 16, %s26
        %s269 = smul.u32 2, %s27
        %s270 = smul.u32 2, %s27
        %v272 = vld [vmem:[%s261] sm:$0xf]
        %v273 = vld [vmem:[%s261 + $0x4] sm:$0xf]
        %v274 = vld [vmem:[%s267] sm:$0xf]
        %v275 = vld [vmem:[%s267 + $0x4] sm:$0xf]
        %v276 = vld [vmem:[%s267 + $0x8] sm:$0xf]
        %v277 = vld [vmem:[%s267 + $0xc] sm:$0xf]
        %v278 = vld [vmem:[%s267 + $0x10] sm:$0xf]
        %v279 = vld [vmem:[%s267 + $0x14] sm:$0xf]
        %v280 = vld [vmem:[%s267 + $0x18] sm:$0xf]
        %v281 = vld [vmem:[%s267 + $0x1c] sm:$0xf]
        %v282 = vld [vmem:[%s267 + $0x20] sm:$0xf]
        %v283 = vld [vmem:[%s267 + $0x24] sm:$0xf]
        %v284 = vld [vmem:[%s267 + $0x28] sm:$0xf]
        %v285 = vld [vmem:[%s267 + $0x2c] sm:$0xf]
        %v286 = vld [vmem:[%s267 + $0x30] sm:$0xf]
        %v287 = vld [vmem:[%s267 + $0x34] sm:$0xf]
        %v288 = vld [vmem:[%s267 + $0x38] sm:$0xf]
        %v289 = vld [vmem:[%s267 + $0x3c] sm:$0xf]
        %v292 = vunpack.c.l.b16 %v272
        %v293 = vunpack.c.l.b16 %v273
        %v294 = vpack.c.b16 %v293, %v292
        %v311 = vunpack.c.l.b16 %v274
        %v312 = vunpack.c.l.b16 %v275
        %v313 = vunpack.c.l.b16 %v276
        %v314 = vunpack.c.l.b16 %v277
        %v315 = vunpack.c.l.b16 %v278
        %v316 = vunpack.c.l.b16 %v279
        %v317 = vunpack.c.l.b16 %v280
        %v318 = vunpack.c.l.b16 %v281
        %v319 = vunpack.c.l.b16 %v282
        %v320 = vunpack.c.l.b16 %v283
        %v321 = vunpack.c.l.b16 %v284
        %v322 = vunpack.c.l.b16 %v285
        %v323 = vunpack.c.l.b16 %v286
        %v324 = vunpack.c.l.b16 %v287
        %v325 = vunpack.c.l.b16 %v288
        %v326 = vunpack.c.l.b16 %v289
        %v327 = vpack.c.b16 %v312, %v311
        %v328 = vpack.c.b16 %v314, %v313
        %v329 = vpack.c.b16 %v316, %v315
        %v330 = vpack.c.b16 %v318, %v317
        %v331 = vpack.c.b16 %v320, %v319
        %v332 = vpack.c.b16 %v322, %v321
        %v333 = vpack.c.b16 %v324, %v323
        %v334 = vpack.c.b16 %v326, %v325
        %vm335 = vcmask 261120
        %v337 = vsel %vm335, %v294, 0
        %v340 = vsel %vm335, %v327, 0
        %v343 = vsel %vm335, %v328, 0
        %v346 = vsel %vm335, %v329, 0
        %v349 = vsel %vm335, %v330, 0
        %v352 = vsel %vm335, %v331, 0
        %v355 = vsel %vm335, %v332, 0
        %v358 = vsel %vm335, %v333, 0
        %v361 = vsel %vm335, %v334, 0
        %363 = vmatprep.subr.bf16.mxu0 0
        %364 = vmatpush1.bf16.xpose.msra.mxu0 %v340
        %365 = vmatprep.subr.bf16.mxu0 0
        %366 = vmatpush1.bf16.xpose.msra.mxu0 %v343
        %367 = vmatprep.subr.bf16.mxu0 0
        %368 = vmatpush1.bf16.xpose.msra.mxu0 %v346
        %369 = vmatprep.subr.bf16.mxu0 0
        %370 = vmatpush1.bf16.xpose.msra.mxu0 %v349
        %371 = vmatprep.subr.bf16.mxu0 0
        %372 = vmatpush1.bf16.xpose.msra.mxu0 %v352
        %373 = vmatprep.subr.bf16.mxu0 0
        %374 = vmatpush1.bf16.xpose.msra.mxu0 %v355
        %375 = vmatprep.subr.bf16.mxu0 0
        %376 = vmatpush1.bf16.xpose.msra.mxu0 %v358
        %377 = vmatprep.subr.bf16.mxu0 0
        %378 = vmatpush1.bf16.xpose.msra.mxu0 %v361
        %379 = vmatprep.subr.bf16.mxu0 0
        %380 = vmatpush1.bf16.xpose.msra.mxu0 0
        %381 = vmatprep.subr.bf16.mxu0 0
        %382 = vmatpush1.bf16.xpose.msra.mxu0 0
        %383 = vmatprep.subr.bf16.mxu0 0
        %384 = vmatpush1.bf16.xpose.msra.mxu0 0
        %385 = vmatprep.subr.bf16.mxu0 0
        %386 = vmatpush1.bf16.xpose.msra.mxu0 0
        %387 = vmatprep.subr.bf16.mxu0 0
        %388 = vmatpush1.bf16.xpose.msra.mxu0 0
        %389 = vmatprep.subr.bf16.mxu0 0
        %390 = vmatpush1.bf16.xpose.msra.mxu0 0
        %391 = vmatprep.subr.bf16.mxu0 0
        %392 = vmatpush1.bf16.xpose.msra.mxu0 0
        %393 = vmatprep.subr.bf16.mxu0 0
        %394 = vmatpush1.bf16.xpose.msra.mxu0 0
        %395 = vmatprep.mubr.bf16.mxu0 0
        %396 = vmatmul.mubr.bf16.gmra.mrb[0].mxu0 %v337
        %v397 = vpop.f32.mrb[0].mxu0
        %v398 = vadd.f32 0.0, %v397
        %v399 = vpop.f32.mrb[0].mxu0
        %v400 = vpop.f32.mrb[0].mxu0
        %v401 = vadd.f32 0.0, %v400
        %v402 = vpop.f32.mrb[0].mxu0
        %403 = vdwg.mxu0
        %v404 = vld [vmem:[%s255] sm:$0xff]
        %v405 = vld [vmem:[%s255 + $0x8] sm:$0xff]
        %v406 = vlaneseq
        %v407 = vand.u32 %v406, 127
        %s408 = smul.u32 %s26, 128
        %v409 = vstv %s408
        %v410 = vadd.s32 %v407, %v409
        %411 = vset.pattern.permute.xlu0 0
        %412 = vperm.xlu0 %411, %v404
        %v413 = vpop.permute.xlu0 %412
        %414 = vset.pattern.permute.xlu0 0
        %415 = vperm.xlu0 %414, %v405
        %v416 = vpop.permute.xlu0 %415
        %vm417 = vcmp.eq.s32.totalorder %v410, %v413
        %vm418 = vcmp.eq.s32.totalorder %v410, %v416
        %v419 = vsel %vm417, %v398, 0.0
        %v420 = vsel %vm418, %v401, 0.0
        %421 = vadd.xlane.f32.xlu0 %v419
        %v422 = vpop.xlane.xlu0 %421
        %423 = vadd.xlane.f32.xlu0 %v420
        %v424 = vpop.xlane.xlu0 %423
        %v425 = vmul.f32 %v422, %v422
        %v426 = vmul.f32 %v424, %v424
        %v427 = vsub.f32 1.0, %v425
        %v428 = vsub.f32 1.0, %v426
        %v429 = vmax.f32 %v427, 0.0
        %v430 = vmax.f32 %v428, 0.0
        %v431 = vmin.f32 %v429, 1.0
        %v432 = vmin.f32 %v430, 1.0
        %v433 = vrsqrt.pop %v431
        %v434 = vmul.f32 %v431, %v433
        %vm435 = vcmp.eq.f32.partialorder %v431, inf
        %v436 = vsel %vm435, %v431, %v434
        %vm437 = vcmp.eq.f32.partialorder %v431, 0.0
        %v438 = vand.u32 %v431, 2147483648
        %v439 = vsel %vm437, %v438, %v436
        %v440 = vrsqrt.pop %v432
        %v441 = vmul.f32 %v432, %v440
        %vm442 = vcmp.eq.f32.partialorder %v432, inf
        %v443 = vsel %vm442, %v432, %v441
        %vm444 = vcmp.eq.f32.partialorder %v432, 0.0
        %v445 = vand.u32 %v432, 2147483648
        %v446 = vsel %vm444, %v445, %v443
        %v447 = vmul.f32 %v422, 0.87758255
        %v448 = vmul.f32 %v424, 0.87758255
        %v449 = vmul.f32 %v439, 0.47942555
        %v450 = vmul.f32 %v446, 0.47942555
        %v451 = vsub.f32 %v447, %v449
        %v452 = vsub.f32 %v448, %v450
        %vm453 = vcmp.gt.f32.partialorder %v422, -0.87758255
        %vm454 = vcmp.gt.f32.partialorder %v424, -0.87758255
        %v455 = vsub.f32 %v422, 0.23971277
        %v456 = vsub.f32 %v424, 0.23971277
        %v457 = vsel %vm453, %v451, %v455
        %v458 = vsel %vm454, %v452, %v456
        %v459 = vsel %vm417, %v457, %v398
        %v460 = vsel %vm418, %v458, %v401
        %v461 = vmul.f32 %v459, 30.0
        %v462 = vmul.f32 %v460, 30.0
        %463 = vst [vmem:[%s243] sm:$0xff] %v461
        %464 = vst [vmem:[%s243 + $0x8] sm:$0xff] %v462
        %v465 = vmul.f32 %v398, 30.0
        %v466 = vmul.f32 %v401, 30.0
        %v467 = vpack.c.bf16 %v466, %v465
        %v469 = vunpack.c.l.b16 %v467
        %v470 = vunpack.c.h.b16 %v467
        %v471 = vpack.c.b16 %v469, %v469
        %v472 = vpack.c.b16 %v470, %v470
        %475 = vst [vmem:[%s250] sm:$0xf] %v471
        %476 = vst [vmem:[%s250 + $0x4] sm:$0xf] %v472
        %s477 = sand.u32 %s122, 1
        %s478 = scalar_lea.sflag [#allocation3], %s477
        %s479 = sand.u32 %s122, 1
        %s480 = smul.addr %s479, 16
        %s481 = scalar_lea.vmem [#allocation2], %s480
        %s482 = sand.u32 %s150, 1
        %s483 = scalar_lea.sflag [#allocation5], %s482
        %s484 = sand.u32 %s150, 1
        %s485 = smul.addr %s484, 8
        %s486 = scalar_lea.vmem [#allocation4], %s485
        // Predicated region
        $region33: #{tpu_custom_call.1} parent=31 // pred_check
          %p487 = pneg %p132
        $region34: #{tpu_custom_call.1} parent=31 // pred_check_branch
          %489 = sbr.rel (%p487) target = $region36
        $region35: #{tpu_custom_call.1} parent=31 // pred_region
          %s490 = smul.u32 2, %s27
          %s492 = ssub.s32 256, 256
          %493 = vsyncadd %s478, %s492
          %s494 = smul.addr %s490, 2
          %s495 = sadd.s32 %s26, %s494
          %s496 = smul.addr %s495, 128
          %s497 = scalar_lea.hbm %s3, %s496
          %s498 = sshll.u32 %s481, 4
          %s499 = int_to_ptr.vmem [resolvable:$true] %s498
          %504 = dma.vmem_to_hbm [thread:$0]  %s499, 256, %s497, %s478, 128, 256, 8
        $region36: #{tpu_custom_call.1} parent=31 // pred_fallthru
          _
        // Predicated region
        $region37: #{tpu_custom_call.1} parent=31 // pred_check
          %p505 = pneg %p160
        $region38: #{tpu_custom_call.1} parent=31 // pred_check_branch
          %507 = sbr.rel (%p505) target = $region40
        $region39: #{tpu_custom_call.1} parent=31 // pred_region
          %s508 = smul.u32 2, %s27
          %s510 = ssub.s32 128, 128
          %511 = vsyncadd %s483, %s510
          %s512 = smul.addr %s508, 2
          %s513 = sadd.s32 %s26, %s512
          %s514 = smul.addr %s513, 64
          %s515 = scalar_lea.hbm %s4, %s514
          %s516 = sshll.u32 %s486, 4
          %s517 = int_to_ptr.vmem [resolvable:$true] %s516
          %522 = dma.vmem_to_hbm [thread:$0]  %s517, 128, %s515, %s483, 64, 128, 4
        $region40: #{tpu_custom_call.1} parent=31 // pred_fallthru
          _
      $region32: #{tpu_custom_call.1} parent=5 // pred_fallthru
        _
      %p523 = scmp.le.s32.totalorder 2, %s17
      // Predicated region
      $region41: #{tpu_custom_call.1} parent=5 // pred_check
        %p524 = pneg %p523
      $region42: #{tpu_custom_call.1} parent=5 // pred_check_branch
        %526 = sbr.rel (%p524) target = $region44
      $region43: #{tpu_custom_call.1} parent=5 // pred_region
        %s527 = ssub.s32 %s17, 2
        // Predicated region
        $region45: #{tpu_custom_call.1} parent=43 // pred_check
          %p528 = pneg %p138
        $region46: #{tpu_custom_call.1} parent=43 // pred_check_branch
          %530 = sbr.rel (%p528) target = $region48
        $region47: #{tpu_custom_call.1} parent=43 // pred_region
          %s531 = sand.u32 %s123, 1
          %s532 = scalar_lea.sflag [#allocation3], %s531
          %s533 = sand.u32 %s123, 1
          %s534 = smul.addr %s533, 16
          %s535 = scalar_lea.vmem [#allocation2], %s534
          %536 = dma.done %s532, 256
        $region48: #{tpu_custom_call.1} parent=43 // pred_fallthru
          _
        // Predicated region
        $region49: #{tpu_custom_call.1} parent=43 // pred_check
          %p537 = pneg %p166
        $region50: #{tpu_custom_call.1} parent=43 // pred_check_branch
          %539 = sbr.rel (%p537) target = $region52
        $region51: #{tpu_custom_call.1} parent=43 // pred_region
          %s540 = sand.u32 %s151, 1
          %s541 = scalar_lea.sflag [#allocation5], %s540
          %s542 = sand.u32 %s151, 1
          %s543 = smul.addr %s542, 8
          %s544 = scalar_lea.vmem [#allocation4], %s543
          %545 = dma.done %s541, 128
        $region52: #{tpu_custom_call.1} parent=43 // pred_fallthru
          _
      $region44: #{tpu_custom_call.1} parent=5 // pred_fallthru
        _
    $region6: #{tpu_custom_call.1} parent=1 // loop_footer
      %s21 = sadd.s32 1, %s17
    $region7: #{tpu_custom_call.1} parent=1 // loop_footer_branch
      %16 = sbr.rel target = $region3
    $region8: #{tpu_custom_call.1} parent=1 // loop_exit
      _
    %546 = vsyncpa [#allocation3], 1
    %s547 = scalar_lea.sflag [#allocation3], 1
    %548 = vsyncpa %s547, 1
    %549 = vsyncpa [#allocation5], 1
    %s550 = scalar_lea.sflag [#allocation5], 1
    %551 = vsyncpa %s550, 1

</llo_original>
